<compile_context>
chip_gen: v7x
topology: tpu7x:2x2x1
jax: 0.10.0
libtpu: 0.0.40
codegen_flags: <defaults>
</compile_context>

<pallas_src>
import jax
import jax.numpy as jnp
from jax.experimental import pallas as pl
from jax.experimental.pallas import tpu as pltpu

HIDDEN = 256
N_CLASSES = 2
C_PAD = 128          # lane-dense padded classifier width
TM_MAX = 512         # max rows per grid step (VMEM: 512x896 bf16 tile ~0.9 MiB/buf)


def _round_up(n, m):
    return ((n + m - 1) // m) * m


def noise_mlp2_kernel(x_ref, w1_ref, b1_ref, w2_ref, b2_ref, nz_ref,
                      w3_ref, b3_ref, out_ref):
    # fc1 + relu1 (bf16 matmul, f32 accumulate, f32 bias/ReLU)
    h = jnp.dot(x_ref[...], w1_ref[...], preferred_element_type=jnp.float32)
    h = jnp.maximum(h + b1_ref[...], 0.0)
    # fc2 + relu2
    h = jnp.dot(h.astype(jnp.bfloat16), w2_ref[...],
                preferred_element_type=jnp.float32)
    h = jnp.maximum(h + b2_ref[...], 0.0)
    # x += noise * rand_like(x)  (noise term precomputed in f32)
    h = h + nz_ref[...]
    # clf (lane-dense padded output)
    out_ref[...] = (jnp.dot(h.astype(jnp.bfloat16), w3_ref[...],
                            preferred_element_type=jnp.float32) + b3_ref[...])


def noise_mlp2_forward(x, params, noise, seed):
    """x: [B, 1, 28, 28] float32.  params: f32 (w1,b1,w2,b2,w3,b3) with w as
    [in, out] and b as [1, out].  Returns [B, 2] float32 logits."""
    w1, b1, w2, b2, w3, b3 = params
    B = x.shape[0]
    K = w1.shape[0]                       # 784
    H = w1.shape[1]                       # 256

    K_pad = _round_up(K, 128)             # 896 = 7*128
    TM = min(TM_MAX, _round_up(B, 8))     # adaptive batch tile, sublane-aligned
    B_pad = _round_up(B, TM)

    # Flatten (== nn.Flatten, row-major) and pad rows/K with zeros; bf16 for MXU.
    x_flat = x.reshape(B, -1).astype(jnp.float32)
    x_flat = jnp.pad(x_flat, ((0, B_pad - B), (0, K_pad - K)))
    x_bf16 = x_flat.astype(jnp.bfloat16)

    w1p = jnp.pad(w1, ((0, K_pad - K), (0, 0))).astype(jnp.bfloat16)
    w2b = w2.astype(jnp.bfloat16)
    w3p = jnp.pad(w3, ((0, 0), (0, C_PAD - w3.shape[1]))).astype(jnp.bfloat16)
    b3p = jnp.pad(b3, ((0, 0), (0, C_PAD - b3.shape[1]))).astype(jnp.float32)

    # Additive uniform [0,1) noise scaled by `noise`, seeded from the noise value.
    u = jax.random.uniform(jax.random.PRNGKey(seed), (B, H), jnp.float32)
    noise_term = jnp.pad(jnp.float32(noise) * u, ((0, B_pad - B), (0, 0)))

    grid = (B_pad // TM,)
    const = lambda i: (0, 0)      # weights/biases: VMEM-resident across steps
    rows = lambda i: (i, 0)       # per-step batch tile

    out = pl.pallas_call(
        noise_mlp2_kernel,
        out_shape=jax.ShapeDtypeStruct((B_pad, C_PAD), jnp.float32),
        grid_spec=pltpu.PrefetchScalarGridSpec(
            num_scalar_prefetch=0,
            grid=grid,
            in_specs=[
                pl.BlockSpec((TM, K_pad), rows),     # x
                pl.BlockSpec((K_pad, H), const),     # w1
                pl.BlockSpec((1, H), const),         # b1
                pl.BlockSpec((H, H), const),         # w2
                pl.BlockSpec((1, H), const),         # b2
                pl.BlockSpec((TM, H), rows),         # noise term
                pl.BlockSpec((H, C_PAD), const),     # w3 (padded)
                pl.BlockSpec((1, C_PAD), const),     # b3 (padded)
            ],
            out_specs=pl.BlockSpec((TM, C_PAD), rows),
        ),
        compiler_params=pltpu.CompilerParams(
            dimension_semantics=("parallel",)),
    )(x_bf16, w1p, b1, w2b, b2, noise_term, w3p, b3p)

    return out[:B, :N_CLASSES]


def reference_forward(x, params, noise_term):
    """Pure-JAX reference with the same bf16-matmul / f32-accumulate math."""
    w1, b1, w2, b2, w3, b3 = params
    xf = x.reshape(x.shape[0], -1)
    h = jnp.dot(xf.astype(jnp.bfloat16), w1.astype(jnp.bfloat16),
                preferred_element_type=jnp.float32) + b1
    h = jnp.maximum(h, 0.0)
    h = jnp.dot(h.astype(jnp.bfloat16), w2.astype(jnp.bfloat16),
                preferred_element_type=jnp.float32) + b2
    h = jnp.maximum(h, 0.0)
    h = h + noise_term
    return jnp.dot(h.astype(jnp.bfloat16), w3.astype(jnp.bfloat16),
                   preferred_element_type=jnp.float32) + b3


def init_params(key):
    # Deterministic init mimicking nn.Linear's U(-1/sqrt(fan_in), 1/sqrt(fan_in)).
    ks = jax.random.split(key, 6)

    def linear(kw, kb, fan_in, fan_out):
        bound = 1.0 / float(fan_in) ** 0.5
        w = jax.random.uniform(kw, (fan_in, fan_out), jnp.float32, -bound, bound)
        b = jax.random.uniform(kb, (1, fan_out), jnp.float32, -bound, bound)
        return w, b

    w1, b1 = linear(ks[0], ks[1], 28 * 28, HIDDEN)
    w2, b2 = linear(ks[2], ks[3], HIDDEN, HIDDEN)
    w3, b3 = linear(ks[4], ks[5], HIDDEN, N_CLASSES)
    return (w1, b1, w2, b2, w3, b3)


if __name__ == "__main__":
    key = jax.random.PRNGKey(0)
    kp, kx, kx2 = jax.random.split(key, 3)
    params = init_params(kp)

    # --- small-batch check (single grid step) ---
    B = 8
    x = jax.random.normal(kx, (B, 1, 28, 28), jnp.float32)  # MNIST-like NCHW

    noise = 0.5
    seed = int(noise * 1000)     # torch.manual_seed(self.noise) analogue
    out = noise_mlp2_forward(x, params, noise=noise, seed=seed)
    jax.block_until_ready(out)
    assert out.shape == (B, N_CLASSES)

    u = jax.random.uniform(jax.random.PRNGKey(seed), (B, HIDDEN), jnp.float32)
    ref = reference_forward(x, params, jnp.float32(noise) * u)
    assert jnp.allclose(out, ref, atol=2e-3, rtol=2e-3), "mismatch vs reference"

    # No-noise path as well.
    out0 = noise_mlp2_forward(x, params, noise=0.0, seed=0)
    ref0 = reference_forward(x, params, jnp.zeros((B, HIDDEN), jnp.float32))
    assert jnp.allclose(out0, ref0, atol=2e-3, rtol=2e-3), "mismatch vs reference"

    # --- larger-batch check (exercises grid > 1 and row padding) ---
    B2 = 600                     # TM=512 -> B_pad=1024, grid=(2,)
    x2 = jax.random.normal(kx2, (B2, 1, 28, 28), jnp.float32)
    out2 = noise_mlp2_forward(x2, params, noise=noise, seed=seed)
    jax.block_until_ready(out2)
    u2 = jax.random.uniform(jax.random.PRNGKey(seed), (B2, HIDDEN), jnp.float32)
    ref2 = reference_forward(x2, params, jnp.float32(noise) * u2)
    assert out2.shape == (B2, N_CLASSES)
    assert jnp.allclose(out2, ref2, atol=2e-3, rtol=2e-3), "mismatch vs reference (grid>1)"

    print("KERNEL_OK")
</pallas_src>

<mosaic_0001>
module attributes {stable_mosaic.version = 11 : i64} {
  func.func @noise_mlp2_kernel(%arg0: i32, %arg1: memref<8x896xbf16, #tpu.memory_space<vmem>>, %arg2: memref<896x256xbf16, #tpu.memory_space<vmem>>, %arg3: memref<1x256xf32, #tpu.memory_space<vmem>>, %arg4: memref<256x256xbf16, #tpu.memory_space<vmem>>, %arg5: memref<1x256xf32, #tpu.memory_space<vmem>>, %arg6: memref<8x256xf32, #tpu.memory_space<vmem>>, %arg7: memref<256x128xbf16, #tpu.memory_space<vmem>>, %arg8: memref<1x128xf32, #tpu.memory_space<vmem>>, %arg9: memref<8x128xf32, #tpu.memory_space<vmem>>) attributes {dimension_semantics = [#tpu.dimension_semantics<parallel>], iteration_bounds = array<i64: 1>, scalar_prefetch = 0 : i64, scratch_operands = 0 : i64, tpu.core_type = #tpu.core_type<tc>, window_params = [{transform_indices = @transform_0, window_bounds = array<i64: 8, 896>}, {pipeline_mode = #tpu.pipeline_mode<synchronous>, transform_indices = @transform_1, window_bounds = array<i64: 896, 256>}, {pipeline_mode = #tpu.pipeline_mode<synchronous>, transform_indices = @transform_2, window_bounds = array<i64: 1, 256>}, {pipeline_mode = #tpu.pipeline_mode<synchronous>, transform_indices = @transform_3, window_bounds = array<i64: 256, 256>}, {pipeline_mode = #tpu.pipeline_mode<synchronous>, transform_indices = @transform_4, window_bounds = array<i64: 1, 256>}, {transform_indices = @transform_5, window_bounds = array<i64: 8, 256>}, {pipeline_mode = #tpu.pipeline_mode<synchronous>, transform_indices = @transform_6, window_bounds = array<i64: 256, 128>}, {pipeline_mode = #tpu.pipeline_mode<synchronous>, transform_indices = @transform_7, window_bounds = array<i64: 1, 128>}, {transform_indices = @transform_8, window_bounds = array<i64: 8, 128>}]} {
    %c0 = arith.constant 0 : index
    %c0_0 = arith.constant 0 : index
    %0 = vector.load %arg1[%c0, %c0_0] : memref<8x896xbf16, #tpu.memory_space<vmem>>, vector<8x896xbf16>
    %c0_1 = arith.constant 0 : index
    %c0_2 = arith.constant 0 : index
    %1 = vector.load %arg2[%c0_1, %c0_2] : memref<896x256xbf16, #tpu.memory_space<vmem>>, vector<896x256xbf16>
    %cst = arith.constant dense<0.000000e+00> : vector<8x256xf32>
    %2 = tpu.matmul %0, %1, %cst {dimension_numbers = #tpu.dot_dimension_numbers<[1], [0], [0], [1], [0, 0, 1, 1], [], []>} : vector<8x896xbf16>, vector<896x256xbf16>, vector<8x256xf32> -> vector<8x256xf32>
    %c0_3 = arith.constant 0 : index
    %c0_4 = arith.constant 0 : index
    %3 = vector.load %arg3[%c0_3, %c0_4] : memref<1x256xf32, #tpu.memory_space<vmem>>, vector<1x256xf32>
    %4 = vector.broadcast %3 : vector<1x256xf32> to vector<8x256xf32>
    %5 = arith.addf %2, %4 : vector<8x256xf32>
    %cst_5 = arith.constant 0.000000e+00 : f32
    %6 = vector.broadcast %cst_5 : f32 to vector<8x256xf32>
    %7 = arith.maximumf %5, %6 : vector<8x256xf32>
    %8 = arith.truncf %7 : vector<8x256xf32> to vector<8x256xbf16>
    %c0_6 = arith.constant 0 : index
    %c0_7 = arith.constant 0 : index
    %9 = vector.load %arg4[%c0_6, %c0_7] : memref<256x256xbf16, #tpu.memory_space<vmem>>, vector<256x256xbf16>
    %cst_8 = arith.constant dense<0.000000e+00> : vector<8x256xf32>
    %10 = tpu.matmul %8, %9, %cst_8 {dimension_numbers = #tpu.dot_dimension_numbers<[1], [0], [0], [1], [0, 0, 1, 1], [], []>} : vector<8x256xbf16>, vector<256x256xbf16>, vector<8x256xf32> -> vector<8x256xf32>
    %c0_9 = arith.constant 0 : index
    %c0_10 = arith.constant 0 : index
    %11 = vector.load %arg5[%c0_9, %c0_10] : memref<1x256xf32, #tpu.memory_space<vmem>>, vector<1x256xf32>
    %12 = vector.broadcast %11 : vector<1x256xf32> to vector<8x256xf32>
    %13 = arith.addf %10, %12 : vector<8x256xf32>
    %cst_11 = arith.constant 0.000000e+00 : f32
    %14 = vector.broadcast %cst_11 : f32 to vector<8x256xf32>
    %15 = arith.maximumf %13, %14 : vector<8x256xf32>
    %c0_12 = arith.constant 0 : index
    %c0_13 = arith.constant 0 : index
    %16 = vector.load %arg6[%c0_12, %c0_13] : memref<8x256xf32, #tpu.memory_space<vmem>>, vector<8x256xf32>
    %17 = arith.addf %15, %16 : vector<8x256xf32>
    %18 = arith.truncf %17 : vector<8x256xf32> to vector<8x256xbf16>
    %c0_14 = arith.constant 0 : index
    %c0_15 = arith.constant 0 : index
    %19 = vector.load %arg7[%c0_14, %c0_15] : memref<256x128xbf16, #tpu.memory_space<vmem>>, vector<256x128xbf16>
    %cst_16 = arith.constant dense<0.000000e+00> : vector<8x128xf32>
    %20 = tpu.matmul %18, %19, %cst_16 {dimension_numbers = #tpu.dot_dimension_numbers<[1], [0], [0], [1], [0, 0, 1, 1], [], []>} : vector<8x256xbf16>, vector<256x128xbf16>, vector<8x128xf32> -> vector<8x128xf32>
    %c0_17 = arith.constant 0 : index
    %c0_18 = arith.constant 0 : index
    %21 = vector.load %arg8[%c0_17, %c0_18] : memref<1x128xf32, #tpu.memory_space<vmem>>, vector<1x128xf32>
    %22 = vector.broadcast %21 : vector<1x128xf32> to vector<8x128xf32>
    %23 = arith.addf %20, %22 : vector<8x128xf32>
    %c0_19 = arith.constant 0 : index
    %c0_20 = arith.constant 0 : index
    %24 = vector.load %arg9[%c0_19, %c0_20] : memref<8x128xf32, #tpu.memory_space<vmem>>, vector<8x128xf32>
    tpu.vector_store %arg9[%c0_19, %c0_20], %23 {strides = array<i32>} : memref<8x128xf32, #tpu.memory_space<vmem>>, vector<8x128xf32>,
    return
  }
  func.func @transform_0(%arg0: i32) -> (i32, i32) {
    %c0_i32 = arith.constant 0 : i32
    %c0_i32_0 = arith.constant 0 : i32
    return %arg0, %c0_i32 : i32, i32
  }
  func.func @transform_1(%arg0: i32) -> (i32, i32) {
    %c0_i32 = arith.constant 0 : i32
    %c0_i32_0 = arith.constant 0 : i32
    %c0_i32_1 = arith.constant 0 : i32
    return %c0_i32, %c0_i32_0 : i32, i32
  }
  func.func @transform_2(%arg0: i32) -> (i32, i32) {
    %c0_i32 = arith.constant 0 : i32
    %c0_i32_0 = arith.constant 0 : i32
    %c0_i32_1 = arith.constant 0 : i32
    return %c0_i32, %c0_i32_0 : i32, i32
  }
  func.func @transform_3(%arg0: i32) -> (i32, i32) {
    %c0_i32 = arith.constant 0 : i32
    %c0_i32_0 = arith.constant 0 : i32
    %c0_i32_1 = arith.constant 0 : i32
    return %c0_i32, %c0_i32_0 : i32, i32
  }
  func.func @transform_4(%arg0: i32) -> (i32, i32) {
    %c0_i32 = arith.constant 0 : i32
    %c0_i32_0 = arith.constant 0 : i32
    %c0_i32_1 = arith.constant 0 : i32
    return %c0_i32, %c0_i32_0 : i32, i32
  }
  func.func @transform_5(%arg0: i32) -> (i32, i32) {
    %c0_i32 = arith.constant 0 : i32
    %c0_i32_0 = arith.constant 0 : i32
    return %arg0, %c0_i32 : i32, i32
  }
  func.func @transform_6(%arg0: i32) -> (i32, i32) {
    %c0_i32 = arith.constant 0 : i32
    %c0_i32_0 = arith.constant 0 : i32
    %c0_i32_1 = arith.constant 0 : i32
    return %c0_i32, %c0_i32_0 : i32, i32
  }
  func.func @transform_7(%arg0: i32) -> (i32, i32) {
    %c0_i32 = arith.constant 0 : i32
    %c0_i32_0 = arith.constant 0 : i32
    %c0_i32_1 = arith.constant 0 : i32
    return %c0_i32, %c0_i32_0 : i32, i32
  }
  func.func @transform_8(%arg0: i32) -> (i32, i32) {
    %c0_i32 = arith.constant 0 : i32
    %c0_i32_0 = arith.constant 0 : i32
    return %arg0, %c0_i32 : i32, i32
  }
}

</mosaic_0001>

<llo_original>
// kernel: tpu_custom_call.1
$region0: #{tpu_custom_call.1}
  #allocation0 [shape = 'u32[]', space=smem, size = 0x4, offset = 0x4, fixed_abs, tag = 'smem constant byte address 0x4 - core index']
  #allocation1 [shape = 'u32[144,128]{1,0:T(1,128)}', space=vmem, size = 0x12000, scoped, tag = 'internal scratch']
  %s0 = inlined_call_operand.hbm [shape: bf16[8,896], index: 0, kind: input, shape index: {}]
  %s1 = inlined_call_operand.hbm [shape: bf16[896,256], index: 1, kind: input, shape index: {}]
  %s2 = inlined_call_operand.vmem [shape: f32[1,256], index: 2, kind: input, shape index: {}]
  %s3 = inlined_call_operand.hbm [shape: bf16[256,256], index: 3, kind: input, shape index: {}]
  %s4 = inlined_call_operand.hbm [shape: f32[1,256], index: 4, kind: input, shape index: {}]
  %s5 = inlined_call_operand.vmem [shape: f32[8,256], index: 5, kind: input, shape index: {}]
  %s6 = inlined_call_operand.hbm [shape: bf16[256,128], index: 6, kind: input, shape index: {}]
  %s7 = inlined_call_operand.vmem [shape: f32[1,128], index: 7, kind: input, shape index: {}]
  %s8 = inlined_call_operand.hbm [shape: f32[8,128], index: 8, kind: output, shape index: {}]
  %s9 = sld [smem:[#allocation0]]
  $region62: #{tpu_custom_call.1} parent=0
    _
  %s11 = ssub.s32 1, %s9
  %s12 = scalar_select 0, %s11, %s9
  $region1: #{tpu_custom_call.1} parent=0
    #allocation2 [shape = 'u8[14336]{0}', space=vmem, size = 0x3800, scoped, tag = 'input window, operand 0, single buffered']
    #allocation3 [shape = 's32[1]{0}', space=sflag, size = 0x4, scoped, tag = 'scoped memory for tpu_custom_call.1']
    #allocation4 [shape = 's32[1]{0}', space=sflag, size = 0x4, scoped, tag = 'scoped memory for tpu_custom_call.1']
    #allocation5 [shape = 'u8[458752]{0}', space=vmem, size = 0x70000, scoped, tag = 'input window, operand 1, single buffered']
    #allocation6 [shape = 's32[1]{0}', space=sflag, size = 0x4, scoped, tag = 'scoped memory for tpu_custom_call.1']
    #allocation7 [shape = 'u8[131072]{0}', space=vmem, size = 0x20000, scoped, tag = 'input window, operand 3, single buffered']
    #allocation8 [shape = 'u8[1024]{0}', space=vmem, size = 0x400, scoped, tag = 'input window, operand 4, single buffered']
    #allocation9 [shape = 's32[1]{0}', space=sflag, size = 0x4, scoped, tag = 'scoped memory for tpu_custom_call.1']
    #allocation10 [shape = 'u8[65536]{0}', space=vmem, size = 0x10000, scoped, tag = 'input window, operand 6, single buffered']
    #allocation11 [shape = 'u8[4096]{0}', space=vmem, size = 0x1000, scoped, tag = 'output window, operand 0, single buffered']
    %13 = vsyncpa [#allocation3], 0
    %14 = vsyncpa [#allocation6], 0
    %15 = vsyncpa [#allocation9], 0
    %16 = vsyncpa [#allocation4], 0
    // Predicated region
    $region2: #{tpu_custom_call.1} parent=1 // pred_check
      _
    $region3: #{tpu_custom_call.1} parent=1 // pred_check_branch
      %18 = sbr.rel (0) target = $region5
    $region4: #{tpu_custom_call.1} parent=1 // pred_region
      %s20 = ssub.s32 448, 448
      %21 = vsyncadd [#allocation3], %s20
      %s23 = sshll.u32 [#allocation2], 4
      %s24 = int_to_ptr.vmem [resolvable:$true] %s23
      %26 = dma.hbm_to_vmem [thread:$0]  %s0, 448, %s24, [#allocation3]
    $region5: #{tpu_custom_call.1} parent=1 // pred_fallthru
      _
    // Predicated region
    $region6: #{tpu_custom_call.1} parent=1 // pred_check
      _
    $region7: #{tpu_custom_call.1} parent=1 // pred_check_branch
      %28 = sbr.rel (0) target = $region9
    $region8: #{tpu_custom_call.1} parent=1 // pred_region
      %s30 = ssub.s32 14336, 14336
      %31 = vsyncadd [#allocation6], %s30
      %s32 = sshll.u32 [#allocation5], 4
      %s33 = int_to_ptr.vmem [resolvable:$true] %s32
      %38 = dma.hbm_to_vmem [thread:$0]  %s1, 14336, %s33, [#allocation6], 128, 128, 8
    $region9: #{tpu_custom_call.1} parent=1 // pred_fallthru
      _
    // Predicated region
    $region10: #{tpu_custom_call.1} parent=1 // pred_check
      _
    $region11: #{tpu_custom_call.1} parent=1 // pred_check_branch
      %40 = sbr.rel (0) target = $region13
    $region12: #{tpu_custom_call.1} parent=1 // pred_region
      _
    $region13: #{tpu_custom_call.1} parent=1 // pred_fallthru
      _
    // Predicated region
    $region14: #{tpu_custom_call.1} parent=1 // pred_check
      _
    $region15: #{tpu_custom_call.1} parent=1 // pred_check_branch
      %42 = sbr.rel (0) target = $region17
    $region16: #{tpu_custom_call.1} parent=1 // pred_region
      %s44 = ssub.s32 4096, 4096
      %45 = vsyncadd [#allocation6], %s44
      %s46 = sshll.u32 [#allocation7], 4
      %s47 = int_to_ptr.vmem [resolvable:$true] %s46
      %52 = dma.hbm_to_vmem [thread:$0]  %s3, 4096, %s47, [#allocation6], 128, 128, 8
    $region17: #{tpu_custom_call.1} parent=1 // pred_fallthru
      _
    // Predicated region
    $region18: #{tpu_custom_call.1} parent=1 // pred_check
      _
    $region19: #{tpu_custom_call.1} parent=1 // pred_check_branch
      %54 = sbr.rel (0) target = $region21
    $region20: #{tpu_custom_call.1} parent=1 // pred_region
      %s56 = ssub.s32 32, 32
      %57 = vsyncadd [#allocation9], %s56
      %s59 = sshll.u32 [#allocation8], 4
      %s60 = int_to_ptr.vmem [resolvable:$true] %s59
      %62 = dma.hbm_to_vmem [thread:$0]  %s4, 32, %s60, [#allocation9]
    $region21: #{tpu_custom_call.1} parent=1 // pred_fallthru
      _
    // Predicated region
    $region22: #{tpu_custom_call.1} parent=1 // pred_check
      _
    $region23: #{tpu_custom_call.1} parent=1 // pred_check_branch
      %64 = sbr.rel (0) target = $region25
    $region24: #{tpu_custom_call.1} parent=1 // pred_region
      _
    $region25: #{tpu_custom_call.1} parent=1 // pred_fallthru
      _
    // Predicated region
    $region26: #{tpu_custom_call.1} parent=1 // pred_check
      _
    $region27: #{tpu_custom_call.1} parent=1 // pred_check_branch
      %66 = sbr.rel (0) target = $region29
    $region28: #{tpu_custom_call.1} parent=1 // pred_region
      %s68 = ssub.s32 2048, 2048
      %69 = vsyncadd [#allocation9], %s68
      %s70 = sshll.u32 [#allocation10], 4
      %s71 = int_to_ptr.vmem [resolvable:$true] %s70
      %76 = dma.hbm_to_vmem [thread:$0]  %s6, 2048, %s71, [#allocation9], 64, 64, 4
    $region29: #{tpu_custom_call.1} parent=1 // pred_fallthru
      _
    // Predicated region
    $region30: #{tpu_custom_call.1} parent=1 // pred_check
      _
    $region31: #{tpu_custom_call.1} parent=1 // pred_check_branch
      %78 = sbr.rel (0) target = $region33
    $region32: #{tpu_custom_call.1} parent=1 // pred_region
      _
    $region33: #{tpu_custom_call.1} parent=1 // pred_fallthru
      _
    // Predicated region
    $region34: #{tpu_custom_call.1} parent=1 // pred_check
      _
    $region35: #{tpu_custom_call.1} parent=1 // pred_check_branch
      %80 = sbr.rel (0) target = $region37
    $region36: #{tpu_custom_call.1} parent=1 // pred_region
      %81 = dma.done [#allocation3], 448
    $region37: #{tpu_custom_call.1} parent=1 // pred_fallthru
      _
    // Predicated region
    $region38: #{tpu_custom_call.1} parent=1 // pred_check
      _
    $region39: #{tpu_custom_call.1} parent=1 // pred_check_branch
      %83 = sbr.rel (0) target = $region41
    $region40: #{tpu_custom_call.1} parent=1 // pred_region
      %84 = dma.done [#allocation6], 14336
    $region41: #{tpu_custom_call.1} parent=1 // pred_fallthru
      _
    // Predicated region
    $region42: #{tpu_custom_call.1} parent=1 // pred_check
      _
    $region43: #{tpu_custom_call.1} parent=1 // pred_check_branch
      %86 = sbr.rel (0) target = $region45
    $region44: #{tpu_custom_call.1} parent=1 // pred_region
      %87 = dma.done [#allocation6], 4096
    $region45: #{tpu_custom_call.1} parent=1 // pred_fallthru
      _
    // Predicated region
    $region46: #{tpu_custom_call.1} parent=1 // pred_check
      _
    $region47: #{tpu_custom_call.1} parent=1 // pred_check_branch
      %89 = sbr.rel (0) target = $region49
    $region48: #{tpu_custom_call.1} parent=1 // pred_region
      %90 = dma.done [#allocation9], 32
    $region49: #{tpu_custom_call.1} parent=1 // pred_fallthru
      _
    // Predicated region
    $region50: #{tpu_custom_call.1} parent=1 // pred_check
      _
    $region51: #{tpu_custom_call.1} parent=1 // pred_check_branch
      %92 = sbr.rel (0) target = $region53
    $region52: #{tpu_custom_call.1} parent=1 // pred_region
      %93 = dma.done [#allocation9], 2048
    $region53: #{tpu_custom_call.1} parent=1 // pred_fallthru
      _
    %v95 = vld [vmem:[#allocation2] sm:$0xff]
    %v96 = vld [vmem:[#allocation2 + $0x8] sm:$0xff]
    %v97 = vld [vmem:[#allocation2 + $0x10] sm:$0xff]
    %v98 = vld [vmem:[#allocation2 + $0x18] sm:$0xf]
    %v99 = vld [vmem:[#allocation5] sm:$0xff]
    %v100 = vld [vmem:[#allocation5 + $0x8] sm:$0xff]
    %v101 = vld [vmem:[#allocation5 + $0x10] sm:$0xff]
    %v102 = vld [vmem:[#allocation5 + $0x18] sm:$0xff]
    %v103 = vld [vmem:[#allocation5 + $0x20] sm:$0xff]
    %v104 = vld [vmem:[#allocation5 + $0x28] sm:$0xff]
    %v105 = vld [vmem:[#allocation5 + $0x30] sm:$0xff]
    %v106 = vld [vmem:[#allocation5 + $0x38] sm:$0xff]
    %v107 = vld [vmem:[#allocation5 + $0x40] sm:$0xff]
    %v108 = vld [vmem:[#allocation5 + $0x48] sm:$0xff]
    %v109 = vld [vmem:[#allocation5 + $0x50] sm:$0xff]
    %v110 = vld [vmem:[#allocation5 + $0x58] sm:$0xff]
    %v111 = vld [vmem:[#allocation5 + $0x60] sm:$0xff]
    %v112 = vld [vmem:[#allocation5 + $0x68] sm:$0xff]
    %v113 = vld [vmem:[#allocation5 + $0x70] sm:$0xff]
    %v114 = vld [vmem:[#allocation5 + $0x78] sm:$0xff]
    %v115 = vld [vmem:[#allocation5 + $0x80] sm:$0xff]
    %v116 = vld [vmem:[#allocation5 + $0x88] sm:$0xff]
    %v117 = vld [vmem:[#allocation5 + $0x90] sm:$0xff]
    %v118 = vld [vmem:[#allocation5 + $0x98] sm:$0xff]
    %v119 = vld [vmem:[#allocation5 + $0xa0] sm:$0xff]
    %v120 = vld [vmem:[#allocation5 + $0xa8] sm:$0xff]
    %v121 = vld [vmem:[#allocation5 + $0xb0] sm:$0xff]
    %v122 = vld [vmem:[#allocation5 + $0xb8] sm:$0xff]
    %v123 = vld [vmem:[#allocation5 + $0xc0] sm:$0xff]
    %v124 = vld [vmem:[#allocation5 + $0xc8] sm:$0xff]
    %v125 = vld [vmem:[#allocation5 + $0xd0] sm:$0xff]
    %v126 = vld [vmem:[#allocation5 + $0xd8] sm:$0xff]
    %v127 = vld [vmem:[#allocation5 + $0xe0] sm:$0xff]
    %v128 = vld [vmem:[#allocation5 + $0xe8] sm:$0xff]
    %v129 = vld [vmem:[#allocation5 + $0xf0] sm:$0xff]
    %v130 = vld [vmem:[#allocation5 + $0xf8] sm:$0xff]
    %v131 = vld [vmem:[#allocation5 + $0x100] sm:$0xff]
    %v132 = vld [vmem:[#allocation5 + $0x108] sm:$0xff]
    %v133 = vld [vmem:[#allocation5 + $0x110] sm:$0xff]
    %v134 = vld [vmem:[#allocation5 + $0x118] sm:$0xff]
    %v135 = vld [vmem:[#allocation5 + $0x120] sm:$0xff]
    %v136 = vld [vmem:[#allocation5 + $0x128] sm:$0xff]
    %v137 = vld [vmem:[#allocation5 + $0x130] sm:$0xff]
    %v138 = vld [vmem:[#allocation5 + $0x138] sm:$0xff]
    %v139 = vld [vmem:[#allocation5 + $0x140] sm:$0xff]
    %v140 = vld [vmem:[#allocation5 + $0x148] sm:$0xff]
    %v141 = vld [vmem:[#allocation5 + $0x150] sm:$0xff]
    %v142 = vld [vmem:[#allocation5 + $0x158] sm:$0xff]
    %v143 = vld [vmem:[#allocation5 + $0x160] sm:$0xff]
    %v144 = vld [vmem:[#allocation5 + $0x168] sm:$0xff]
    %v145 = vld [vmem:[#allocation5 + $0x170] sm:$0xff]
    %v146 = vld [vmem:[#allocation5 + $0x178] sm:$0xff]
    %v147 = vld [vmem:[#allocation5 + $0x180] sm:$0xff]
    %v148 = vld [vmem:[#allocation5 + $0x188] sm:$0xff]
    %v149 = vld [vmem:[#allocation5 + $0x190] sm:$0xff]
    %v150 = vld [vmem:[#allocation5 + $0x198] sm:$0xff]
    %v151 = vld [vmem:[#allocation5 + $0x1a0] sm:$0xff]
    %v152 = vld [vmem:[#allocation5 + $0x1a8] sm:$0xff]
    %v153 = vld [vmem:[#allocation5 + $0x1b0] sm:$0xff]
    %v154 = vld [vmem:[#allocation5 + $0x1b8] sm:$0xff]
    %v155 = vld [vmem:[#allocation5 + $0x1c0] sm:$0xff]
    %v156 = vld [vmem:[#allocation5 + $0x1c8] sm:$0xff]
    %v157 = vld [vmem:[#allocation5 + $0x1d0] sm:$0xff]
    %v158 = vld [vmem:[#allocation5 + $0x1d8] sm:$0xff]
    %v159 = vld [vmem:[#allocation5 + $0x1e0] sm:$0xff]
    %v160 = vld [vmem:[#allocation5 + $0x1e8] sm:$0xff]
    %v161 = vld [vmem:[#allocation5 + $0x1f0] sm:$0xff]
    %v162 = vld [vmem:[#allocation5 + $0x1f8] sm:$0xff]
    %v163 = vld [vmem:[#allocation5 + $0x200] sm:$0xff]
    %v164 = vld [vmem:[#allocation5 + $0x208] sm:$0xff]
    %v165 = vld [vmem:[#allocation5 + $0x210] sm:$0xff]
    %v166 = vld [vmem:[#allocation5 + $0x218] sm:$0xff]
    %v167 = vld [vmem:[#allocation5 + $0x220] sm:$0xff]
    %v168 = vld [vmem:[#allocation5 + $0x228] sm:$0xff]
    %v169 = vld [vmem:[#allocation5 + $0x230] sm:$0xff]
    %v170 = vld [vmem:[#allocation5 + $0x238] sm:$0xff]
    %v171 = vld [vmem:[#allocation5 + $0x240] sm:$0xff]
    %v172 = vld [vmem:[#allocation5 + $0x248] sm:$0xff]
    %v173 = vld [vmem:[#allocation5 + $0x250] sm:$0xff]
    %v174 = vld [vmem:[#allocation5 + $0x258] sm:$0xff]
    %v175 = vld [vmem:[#allocation5 + $0x260] sm:$0xff]
    %v176 = vld [vmem:[#allocation5 + $0x268] sm:$0xff]
    %v177 = vld [vmem:[#allocation5 + $0x270] sm:$0xff]
    %v178 = vld [vmem:[#allocation5 + $0x278] sm:$0xff]
    %v179 = vld [vmem:[#allocation5 + $0x280] sm:$0xff]
    %v180 = vld [vmem:[#allocation5 + $0x288] sm:$0xff]
    %v181 = vld [vmem:[#allocation5 + $0x290] sm:$0xff]
    %v182 = vld [vmem:[#allocation5 + $0x298] sm:$0xff]
    %v183 = vld [vmem:[#allocation5 + $0x2a0] sm:$0xff]
    %v184 = vld [vmem:[#allocation5 + $0x2a8] sm:$0xff]
    %v185 = vld [vmem:[#allocation5 + $0x2b0] sm:$0xff]
    %v186 = vld [vmem:[#allocation5 + $0x2b8] sm:$0xff]
    %v187 = vld [vmem:[#allocation5 + $0x2c0] sm:$0xff]
    %v188 = vld [vmem:[#allocation5 + $0x2c8] sm:$0xff]
    %v189 = vld [vmem:[#allocation5 + $0x2d0] sm:$0xff]
    %v190 = vld [vmem:[#allocation5 + $0x2d8] sm:$0xff]
    %v191 = vld [vmem:[#allocation5 + $0x2e0] sm:$0xff]
    %v192 = vld [vmem:[#allocation5 + $0x2e8] sm:$0xff]
    %v193 = vld [vmem:[#allocation5 + $0x2f0] sm:$0xff]
    %v194 = vld [vmem:[#allocation5 + $0x2f8] sm:$0xff]
    %v195 = vld [vmem:[#allocation5 + $0x300] sm:$0xff]
    %v196 = vld [vmem:[#allocation5 + $0x308] sm:$0xff]
    %v197 = vld [vmem:[#allocation5 + $0x310] sm:$0xff]
    %v198 = vld [vmem:[#allocation5 + $0x318] sm:$0xff]
    %v199 = vld [vmem:[#allocation5 + $0x320] sm:$0xff]
    %v200 = vld [vmem:[#allocation5 + $0x328] sm:$0xff]
    %v201 = vld [vmem:[#allocation5 + $0x330] sm:$0xff]
    %v202 = vld [vmem:[#allocation5 + $0x338] sm:$0xff]
    %v203 = vld [vmem:[#allocation5 + $0x340] sm:$0xff]
    %v204 = vld [vmem:[#allocation5 + $0x348] sm:$0xff]
    %v205 = vld [vmem:[#allocation5 + $0x350] sm:$0xff]
    %v206 = vld [vmem:[#allocation5 + $0x358] sm:$0xff]
    %v207 = vld [vmem:[#allocation5 + $0x360] sm:$0xff]
    %v208 = vld [vmem:[#allocation5 + $0x368] sm:$0xff]
    %v209 = vld [vmem:[#allocation5 + $0x370] sm:$0xff]
    %v210 = vld [vmem:[#allocation5 + $0x378] sm:$0xff]
    %v211 = vld [vmem:[%s2] sm:$0x3]
    %v213 = vlaneseq
    %v214 = vshrl.u32 %v213, 7
    %v215 = vsub.s32 0, %v214
    %v216 = vrot.slane %v211, %v215
    %v217 = vlaneseq
    %v218 = vshrl.u32 %v217, 7
    %v219 = vsub.s32 1, %v218
    %v220 = vrot.slane %v211, %v219
    %v227 = vunpack.c.l.b16 %v95
    %v228 = vunpack.c.h.b16 %v95
    %v229 = vunpack.c.l.b16 %v96
    %v230 = vunpack.c.h.b16 %v96
    %v231 = vunpack.c.l.b16 %v97
    %v232 = vunpack.c.h.b16 %v97
    %v233 = vunpack.c.l.b16 %v98
    %v234 = vpack.c.b16 %v227, %v227
    %v235 = vpack.c.b16 %v228, %v228
    %v236 = vpack.c.b16 %v229, %v229
    %v237 = vpack.c.b16 %v230, %v230
    %v238 = vpack.c.b16 %v231, %v231
    %v239 = vpack.c.b16 %v232, %v232
    %v240 = vpack.c.b16 %v233, %v233
    %v360 = vunpack.c.l.b16 %v99
    %v361 = vunpack.c.h.b16 %v99
    %v362 = vunpack.c.l.b16 %v100
    %v363 = vunpack.c.h.b16 %v100
    %v364 = vunpack.c.l.b16 %v101
    %v365 = vunpack.c.h.b16 %v101
    %v366 = vunpack.c.l.b16 %v102
    %v367 = vunpack.c.h.b16 %v102
    %v368 = vunpack.c.l.b16 %v103
    %v369 = vunpack.c.h.b16 %v103
    %v370 = vunpack.c.l.b16 %v104
    %v371 = vunpack.c.h.b16 %v104
    %v372 = vunpack.c.l.b16 %v105
    %v373 = vunpack.c.h.b16 %v105
    %v374 = vunpack.c.l.b16 %v106
    %v375 = vunpack.c.h.b16 %v106
    %v376 = vunpack.c.l.b16 %v107
    %v377 = vunpack.c.h.b16 %v107
    %v378 = vunpack.c.l.b16 %v108
    %v379 = vunpack.c.h.b16 %v108
    %v380 = vunpack.c.l.b16 %v109
    %v381 = vunpack.c.h.b16 %v109
    %v382 = vunpack.c.l.b16 %v110
    %v383 = vunpack.c.h.b16 %v110
    %v384 = vunpack.c.l.b16 %v111
    %v385 = vunpack.c.h.b16 %v111
    %v386 = vunpack.c.l.b16 %v112
    %v387 = vunpack.c.h.b16 %v112
    %v388 = vunpack.c.l.b16 %v113
    %v389 = vunpack.c.h.b16 %v113
    %v390 = vunpack.c.l.b16 %v114
    %v391 = vunpack.c.h.b16 %v114
    %v392 = vunpack.c.l.b16 %v115
    %v393 = vunpack.c.h.b16 %v115
    %v394 = vunpack.c.l.b16 %v116
    %v395 = vunpack.c.h.b16 %v116
    %v396 = vunpack.c.l.b16 %v117
    %v397 = vunpack.c.h.b16 %v117
    %v398 = vunpack.c.l.b16 %v118
    %v399 = vunpack.c.h.b16 %v118
    %v400 = vunpack.c.l.b16 %v119
    %v401 = vunpack.c.h.b16 %v119
    %v402 = vunpack.c.l.b16 %v120
    %v403 = vunpack.c.h.b16 %v120
    %v404 = vunpack.c.l.b16 %v121
    %v405 = vunpack.c.h.b16 %v121
    %v406 = vunpack.c.l.b16 %v122
    %v407 = vunpack.c.h.b16 %v122
    %v408 = vunpack.c.l.b16 %v123
    %v409 = vunpack.c.h.b16 %v123
    %v410 = vunpack.c.l.b16 %v124
    %v411 = vunpack.c.h.b16 %v124
    %v412 = vunpack.c.l.b16 %v125
    %v413 = vunpack.c.h.b16 %v125
    %v414 = vunpack.c.l.b16 %v126
    %v415 = vunpack.c.h.b16 %v126
    %v416 = vunpack.c.l.b16 %v127
    %v417 = vunpack.c.h.b16 %v127
    %v418 = vunpack.c.l.b16 %v128
    %v419 = vunpack.c.h.b16 %v128
    %v420 = vunpack.c.l.b16 %v129
    %v421 = vunpack.c.h.b16 %v129
    %v422 = vunpack.c.l.b16 %v130
    %v423 = vunpack.c.h.b16 %v130
    %v424 = vunpack.c.l.b16 %v131
    %v425 = vunpack.c.h.b16 %v131
    %v426 = vunpack.c.l.b16 %v132
    %v427 = vunpack.c.h.b16 %v132
    %v428 = vunpack.c.l.b16 %v133
    %v429 = vunpack.c.h.b16 %v133
    %v430 = vunpack.c.l.b16 %v134
    %v431 = vunpack.c.h.b16 %v134
    %v432 = vunpack.c.l.b16 %v135
    %v433 = vunpack.c.h.b16 %v135
    %v434 = vunpack.c.l.b16 %v136
    %v435 = vunpack.c.h.b16 %v136
    %v436 = vunpack.c.l.b16 %v137
    %v437 = vunpack.c.h.b16 %v137
    %v438 = vunpack.c.l.b16 %v138
    %v439 = vunpack.c.h.b16 %v138
    %v440 = vunpack.c.l.b16 %v139
    %v441 = vunpack.c.h.b16 %v139
    %v442 = vunpack.c.l.b16 %v140
    %v443 = vunpack.c.h.b16 %v140
    %v444 = vunpack.c.l.b16 %v141
    %v445 = vunpack.c.h.b16 %v141
    %v446 = vunpack.c.l.b16 %v142
    %v447 = vunpack.c.h.b16 %v142
    %v448 = vunpack.c.l.b16 %v143
    %v449 = vunpack.c.h.b16 %v143
    %v450 = vunpack.c.l.b16 %v144
    %v451 = vunpack.c.h.b16 %v144
    %v452 = vunpack.c.l.b16 %v145
    %v453 = vunpack.c.h.b16 %v145
    %v454 = vunpack.c.l.b16 %v146
    %v455 = vunpack.c.h.b16 %v146
    %v456 = vunpack.c.l.b16 %v147
    %v457 = vunpack.c.h.b16 %v147
    %v458 = vunpack.c.l.b16 %v148
    %v459 = vunpack.c.h.b16 %v148
    %v460 = vunpack.c.l.b16 %v149
    %v461 = vunpack.c.h.b16 %v149
    %v462 = vunpack.c.l.b16 %v150
    %v463 = vunpack.c.h.b16 %v150
    %v464 = vunpack.c.l.b16 %v151
    %v465 = vunpack.c.h.b16 %v151
    %v466 = vunpack.c.l.b16 %v152
    %v467 = vunpack.c.h.b16 %v152
    %v468 = vunpack.c.l.b16 %v153
    %v469 = vunpack.c.h.b16 %v153
    %v470 = vunpack.c.l.b16 %v154
    %v471 = vunpack.c.h.b16 %v154
    %v472 = vunpack.c.l.b16 %v155
    %v473 = vunpack.c.h.b16 %v155
    %v474 = vunpack.c.l.b16 %v156
    %v475 = vunpack.c.h.b16 %v156
    %v476 = vunpack.c.l.b16 %v157
    %v477 = vunpack.c.h.b16 %v157
    %v478 = vunpack.c.l.b16 %v158
    %v479 = vunpack.c.h.b16 %v158
    %v480 = vunpack.c.l.b16 %v159
    %v481 = vunpack.c.h.b16 %v159
    %v482 = vunpack.c.l.b16 %v160
    %v483 = vunpack.c.h.b16 %v160
    %v484 = vunpack.c.l.b16 %v161
    %v485 = vunpack.c.h.b16 %v161
    %v486 = vunpack.c.l.b16 %v162
    %v487 = vunpack.c.h.b16 %v162
    %v488 = vunpack.c.l.b16 %v163
    %v489 = vunpack.c.h.b16 %v163
    %v490 = vunpack.c.l.b16 %v164
    %v491 = vunpack.c.h.b16 %v164
    %v492 = vunpack.c.l.b16 %v165
    %v493 = vunpack.c.h.b16 %v165
    %v494 = vunpack.c.l.b16 %v166
    %v495 = vunpack.c.h.b16 %v166
    %v496 = vunpack.c.l.b16 %v167
    %v497 = vunpack.c.h.b16 %v167
    %v498 = vunpack.c.l.b16 %v168
    %v499 = vunpack.c.h.b16 %v168
    %v500 = vunpack.c.l.b16 %v169
    %v501 = vunpack.c.h.b16 %v169
    %v502 = vunpack.c.l.b16 %v170
    %v503 = vunpack.c.h.b16 %v170
    %v504 = vunpack.c.l.b16 %v171
    %v505 = vunpack.c.h.b16 %v171
    %v506 = vunpack.c.l.b16 %v172
    %v507 = vunpack.c.h.b16 %v172
    %v508 = vunpack.c.l.b16 %v173
    %v509 = vunpack.c.h.b16 %v173
    %v510 = vunpack.c.l.b16 %v174
    %v511 = vunpack.c.h.b16 %v174
    %v512 = vunpack.c.l.b16 %v175
    %v513 = vunpack.c.h.b16 %v175
    %v514 = vunpack.c.l.b16 %v176
    %v515 = vunpack.c.h.b16 %v176
    %v516 = vunpack.c.l.b16 %v177
    %v517 = vunpack.c.h.b16 %v177
    %v518 = vunpack.c.l.b16 %v178
    %v519 = vunpack.c.h.b16 %v178
    %v520 = vunpack.c.l.b16 %v179
    %v521 = vunpack.c.h.b16 %v179
    %v522 = vunpack.c.l.b16 %v180
    %v523 = vunpack.c.h.b16 %v180
    %v524 = vunpack.c.l.b16 %v181
    %v525 = vunpack.c.h.b16 %v181
    %v526 = vunpack.c.l.b16 %v182
    %v527 = vunpack.c.h.b16 %v182
    %v528 = vunpack.c.l.b16 %v183
    %v529 = vunpack.c.h.b16 %v183
    %v530 = vunpack.c.l.b16 %v184
    %v531 = vunpack.c.h.b16 %v184
    %v532 = vunpack.c.l.b16 %v185
    %v533 = vunpack.c.h.b16 %v185
    %v534 = vunpack.c.l.b16 %v186
    %v535 = vunpack.c.h.b16 %v186
    %v536 = vunpack.c.l.b16 %v187
    %v537 = vunpack.c.h.b16 %v187
    %v538 = vunpack.c.l.b16 %v188
    %v539 = vunpack.c.h.b16 %v188
    %v540 = vunpack.c.l.b16 %v189
    %v541 = vunpack.c.h.b16 %v189
    %v542 = vunpack.c.l.b16 %v190
    %v543 = vunpack.c.h.b16 %v190
    %v544 = vunpack.c.l.b16 %v191
    %v545 = vunpack.c.h.b16 %v191
    %v546 = vunpack.c.l.b16 %v192
    %v547 = vunpack.c.h.b16 %v192
    %v548 = vunpack.c.l.b16 %v193
    %v549 = vunpack.c.h.b16 %v193
    %v550 = vunpack.c.l.b16 %v194
    %v551 = vunpack.c.h.b16 %v194
    %v552 = vunpack.c.l.b16 %v195
    %v553 = vunpack.c.h.b16 %v195
    %v554 = vunpack.c.l.b16 %v196
    %v555 = vunpack.c.h.b16 %v196
    %v556 = vunpack.c.l.b16 %v197
    %v557 = vunpack.c.h.b16 %v197
    %v558 = vunpack.c.l.b16 %v198
    %v559 = vunpack.c.h.b16 %v198
    %v560 = vunpack.c.l.b16 %v199
    %v561 = vunpack.c.h.b16 %v199
    %v562 = vunpack.c.l.b16 %v200
    %v563 = vunpack.c.h.b16 %v200
    %v564 = vunpack.c.l.b16 %v201
    %v565 = vunpack.c.h.b16 %v201
    %v566 = vunpack.c.l.b16 %v202
    %v567 = vunpack.c.h.b16 %v202
    %v568 = vunpack.c.l.b16 %v203
    %v569 = vunpack.c.h.b16 %v203
    %v570 = vunpack.c.l.b16 %v204
    %v571 = vunpack.c.h.b16 %v204
    %v572 = vunpack.c.l.b16 %v205
    %v573 = vunpack.c.h.b16 %v205
    %v574 = vunpack.c.l.b16 %v206
    %v575 = vunpack.c.h.b16 %v206
    %v576 = vunpack.c.l.b16 %v207
    %v577 = vunpack.c.h.b16 %v207
    %v578 = vunpack.c.l.b16 %v208
    %v579 = vunpack.c.h.b16 %v208
    %v580 = vunpack.c.l.b16 %v209
    %v581 = vunpack.c.h.b16 %v209
    %v582 = vunpack.c.l.b16 %v210
    %v583 = vunpack.c.h.b16 %v210
    %v584 = vpack.c.b16 %v362, %v360
    %v585 = vpack.c.b16 %v363, %v361
    %v586 = vpack.c.b16 %v366, %v364
    %v587 = vpack.c.b16 %v367, %v365
    %v588 = vpack.c.b16 %v370, %v368
    %v589 = vpack.c.b16 %v371, %v369
    %v590 = vpack.c.b16 %v374, %v372
    %v591 = vpack.c.b16 %v375, %v373
    %v592 = vpack.c.b16 %v378, %v376
    %v593 = vpack.c.b16 %v379, %v377
    %v594 = vpack.c.b16 %v382, %v380
    %v595 = vpack.c.b16 %v383, %v381
    %v596 = vpack.c.b16 %v386, %v384
    %v597 = vpack.c.b16 %v387, %v385
    %v598 = vpack.c.b16 %v390, %v388
    %v599 = vpack.c.b16 %v391, %v389
    %v600 = vpack.c.b16 %v394, %v392
    %v601 = vpack.c.b16 %v395, %v393
    %v602 = vpack.c.b16 %v398, %v396
    %v603 = vpack.c.b16 %v399, %v397
    %v604 = vpack.c.b16 %v402, %v400
    %v605 = vpack.c.b16 %v403, %v401
    %v606 = vpack.c.b16 %v406, %v404
    %v607 = vpack.c.b16 %v407, %v405
    %v608 = vpack.c.b16 %v410, %v408
    %v609 = vpack.c.b16 %v411, %v409
    %v610 = vpack.c.b16 %v414, %v412
    %v611 = vpack.c.b16 %v415, %v413
    %v612 = vpack.c.b16 %v418, %v416
    %v613 = vpack.c.b16 %v419, %v417
    %v614 = vpack.c.b16 %v422, %v420
    %v615 = vpack.c.b16 %v423, %v421
    %v616 = vpack.c.b16 %v426, %v424
    %v617 = vpack.c.b16 %v427, %v425
    %v618 = vpack.c.b16 %v430, %v428
    %v619 = vpack.c.b16 %v431, %v429
    %v620 = vpack.c.b16 %v434, %v432
    %v621 = vpack.c.b16 %v435, %v433
    %v622 = vpack.c.b16 %v438, %v436
    %v623 = vpack.c.b16 %v439, %v437
    %v624 = vpack.c.b16 %v442, %v440
    %v625 = vpack.c.b16 %v443, %v441
    %v626 = vpack.c.b16 %v446, %v444
    %v627 = vpack.c.b16 %v447, %v445
    %v628 = vpack.c.b16 %v450, %v448
    %v629 = vpack.c.b16 %v451, %v449
    %v630 = vpack.c.b16 %v454, %v452
    %v631 = vpack.c.b16 %v455, %v453
    %v632 = vpack.c.b16 %v458, %v456
    %v633 = vpack.c.b16 %v459, %v457
    %v634 = vpack.c.b16 %v462, %v460
    %v635 = vpack.c.b16 %v463, %v461
    %v636 = vpack.c.b16 %v466, %v464
    %v637 = vpack.c.b16 %v467, %v465
    %v638 = vpack.c.b16 %v470, %v468
    %v639 = vpack.c.b16 %v471, %v469
    %v640 = vpack.c.b16 %v474, %v472
    %v641 = vpack.c.b16 %v475, %v473
    %v642 = vpack.c.b16 %v478, %v476
    %v643 = vpack.c.b16 %v479, %v477
    %v644 = vpack.c.b16 %v482, %v480
    %v645 = vpack.c.b16 %v483, %v481
    %v646 = vpack.c.b16 %v486, %v484
    %v647 = vpack.c.b16 %v487, %v485
    %v648 = vpack.c.b16 %v490, %v488
    %v649 = vpack.c.b16 %v491, %v489
    %v650 = vpack.c.b16 %v494, %v492
    %v651 = vpack.c.b16 %v495, %v493
    %v652 = vpack.c.b16 %v498, %v496
    %v653 = vpack.c.b16 %v499, %v497
    %v654 = vpack.c.b16 %v502, %v500
    %v655 = vpack.c.b16 %v503, %v501
    %v656 = vpack.c.b16 %v506, %v504
    %v657 = vpack.c.b16 %v507, %v505
    %v658 = vpack.c.b16 %v510, %v508
    %v659 = vpack.c.b16 %v511, %v509
    %v660 = vpack.c.b16 %v514, %v512
    %v661 = vpack.c.b16 %v515, %v513
    %v662 = vpack.c.b16 %v518, %v516
    %v663 = vpack.c.b16 %v519, %v517
    %v664 = vpack.c.b16 %v522, %v520
    %v665 = vpack.c.b16 %v523, %v521
    %v666 = vpack.c.b16 %v526, %v524
    %v667 = vpack.c.b16 %v527, %v525
    %v668 = vpack.c.b16 %v530, %v528
    %v669 = vpack.c.b16 %v531, %v529
    %v670 = vpack.c.b16 %v534, %v532
    %v671 = vpack.c.b16 %v535, %v533
    %v672 = vpack.c.b16 %v538, %v536
    %v673 = vpack.c.b16 %v539, %v537
    %v674 = vpack.c.b16 %v542, %v540
    %v675 = vpack.c.b16 %v543, %v541
    %v676 = vpack.c.b16 %v546, %v544
    %v677 = vpack.c.b16 %v547, %v545
    %v678 = vpack.c.b16 %v550, %v548
    %v679 = vpack.c.b16 %v551, %v549
    %v680 = vpack.c.b16 %v554, %v552
    %v681 = vpack.c.b16 %v555, %v553
    %v682 = vpack.c.b16 %v558, %v556
    %v683 = vpack.c.b16 %v559, %v557
    %v684 = vpack.c.b16 %v562, %v560
    %v685 = vpack.c.b16 %v563, %v561
    %v686 = vpack.c.b16 %v566, %v564
    %v687 = vpack.c.b16 %v567, %v565
    %v688 = vpack.c.b16 %v570, %v568
    %v689 = vpack.c.b16 %v571, %v569
    %v690 = vpack.c.b16 %v574, %v572
    %v691 = vpack.c.b16 %v575, %v573
    %v692 = vpack.c.b16 %v578, %v576
    %v693 = vpack.c.b16 %v579, %v577
    %v694 = vpack.c.b16 %v582, %v580
    %v695 = vpack.c.b16 %v583, %v581
    %808 = vmatprep.subr.bf16.mxu0 %v585
    %809 = vmatpush1.bf16.msra.mxu0 %v584
    %810 = vmatprep.subr.bf16.mxu0 %v587
    %811 = vmatpush1.bf16.msra.mxu0 %v586
    %812 = vmatprep.subr.bf16.mxu0 %v589
    %813 = vmatpush1.bf16.msra.mxu0 %v588
    %814 = vmatprep.subr.bf16.mxu0 %v591
    %815 = vmatpush1.bf16.msra.mxu0 %v590
    %816 = vmatprep.subr.bf16.mxu0 %v593
    %817 = vmatpush1.bf16.msra.mxu0 %v592
    %818 = vmatprep.subr.bf16.mxu0 %v595
    %819 = vmatpush1.bf16.msra.mxu0 %v594
    %820 = vmatprep.subr.bf16.mxu0 %v597
    %821 = vmatpush1.bf16.msra.mxu0 %v596
    %822 = vmatprep.subr.bf16.mxu0 %v599
    %823 = vmatpush1.bf16.msra.mxu0 %v598
    %824 = vmatprep.subr.bf16.mxu0 %v601
    %825 = vmatpush1.bf16.msra.mxu0 %v600
    %826 = vmatprep.subr.bf16.mxu0 %v603
    %827 = vmatpush1.bf16.msra.mxu0 %v602
    %828 = vmatprep.subr.bf16.mxu0 %v605
    %829 = vmatpush1.bf16.msra.mxu0 %v604
    %830 = vmatprep.subr.bf16.mxu0 %v607
    %831 = vmatpush1.bf16.msra.mxu0 %v606
    %832 = vmatprep.subr.bf16.mxu0 %v609
    %833 = vmatpush1.bf16.msra.mxu0 %v608
    %834 = vmatprep.subr.bf16.mxu0 %v611
    %835 = vmatpush1.bf16.msra.mxu0 %v610
    %836 = vmatprep.subr.bf16.mxu0 %v613
    %837 = vmatpush1.bf16.msra.mxu0 %v612
    %838 = vmatprep.subr.bf16.mxu0 %v615
    %839 = vmatpush1.bf16.msra.mxu0 %v614
    %840 = vmatprep.mubr.bf16.mxu0 %v235
    %841 = vmatmul.mubr.bf16.gmra.mrb[0].mxu0 %v234
    %v842 = vpop.f32.mrb[0].mxu0
    %v843 = vadd.f32 %v216, %v842
    %v844 = vpop.f32.mrb[0].mxu0
    %v845 = vadd.f32 %v220, %v844
    %v846 = vpop.f32.mrb[0].mxu0
    %v847 = vpop.f32.mrb[0].mxu0
    %848 = vdwg.mxu0
    %849 = vmatprep.subr.bf16.mxu0 %v617
    %850 = vmatpush1.bf16.msra.mxu0 %v616
    %851 = vmatprep.subr.bf16.mxu0 %v619
    %852 = vmatpush1.bf16.msra.mxu0 %v618
    %853 = vmatprep.subr.bf16.mxu0 %v621
    %854 = vmatpush1.bf16.msra.mxu0 %v620
    %855 = vmatprep.subr.bf16.mxu0 %v623
    %856 = vmatpush1.bf16.msra.mxu0 %v622
    %857 = vmatprep.subr.bf16.mxu0 %v625
    %858 = vmatpush1.bf16.msra.mxu0 %v624
    %859 = vmatprep.subr.bf16.mxu0 %v627
    %860 = vmatpush1.bf16.msra.mxu0 %v626
    %861 = vmatprep.subr.bf16.mxu0 %v629
    %862 = vmatpush1.bf16.msra.mxu0 %v628
    %863 = vmatprep.subr.bf16.mxu0 %v631
    %864 = vmatpush1.bf16.msra.mxu0 %v630
    %865 = vmatprep.subr.bf16.mxu0 %v633
    %866 = vmatpush1.bf16.msra.mxu0 %v632
    %867 = vmatprep.subr.bf16.mxu0 %v635
    %868 = vmatpush1.bf16.msra.mxu0 %v634
    %869 = vmatprep.subr.bf16.mxu0 %v637
    %870 = vmatpush1.bf16.msra.mxu0 %v636
    %871 = vmatprep.subr.bf16.mxu0 %v639
    %872 = vmatpush1.bf16.msra.mxu0 %v638
    %873 = vmatprep.subr.bf16.mxu0 %v641
    %874 = vmatpush1.bf16.msra.mxu0 %v640
    %875 = vmatprep.subr.bf16.mxu0 %v643
    %876 = vmatpush1.bf16.msra.mxu0 %v642
    %877 = vmatprep.subr.bf16.mxu0 %v645
    %878 = vmatpush1.bf16.msra.mxu0 %v644
    %879 = vmatprep.subr.bf16.mxu0 %v647
    %880 = vmatpush1.bf16.msra.mxu0 %v646
    %881 = vmatprep.mubr.bf16.mxu0 %v237
    %882 = vmatmul.mubr.bf16.gmra.mrb[0].mxu0 %v236
    %v883 = vpop.f32.mrb[0].mxu0
    %v884 = vadd.f32 %v843, %v883
    %v885 = vpop.f32.mrb[0].mxu0
    %v886 = vadd.f32 %v845, %v885
    %v887 = vpop.f32.mrb[0].mxu0
    %v888 = vpop.f32.mrb[0].mxu0
    %889 = vdwg.mxu0
    %890 = vmatprep.subr.bf16.mxu0 %v649
    %891 = vmatpush1.bf16.msra.mxu0 %v648
    %892 = vmatprep.subr.bf16.mxu0 %v651
    %893 = vmatpush1.bf16.msra.mxu0 %v650
    %894 = vmatprep.subr.bf16.mxu0 %v653
    %895 = vmatpush1.bf16.msra.mxu0 %v652
    %896 = vmatprep.subr.bf16.mxu0 %v655
    %897 = vmatpush1.bf16.msra.mxu0 %v654
    %898 = vmatprep.subr.bf16.mxu0 %v657
    %899 = vmatpush1.bf16.msra.mxu0 %v656
    %900 = vmatprep.subr.bf16.mxu0 %v659
    %901 = vmatpush1.bf16.msra.mxu0 %v658
    %902 = vmatprep.subr.bf16.mxu0 %v661
    %903 = vmatpush1.bf16.msra.mxu0 %v660
    %904 = vmatprep.subr.bf16.mxu0 %v663
    %905 = vmatpush1.bf16.msra.mxu0 %v662
    %906 = vmatprep.subr.bf16.mxu0 %v665
    %907 = vmatpush1.bf16.msra.mxu0 %v664
    %908 = vmatprep.subr.bf16.mxu0 %v667
    %909 = vmatpush1.bf16.msra.mxu0 %v666
    %910 = vmatprep.subr.bf16.mxu0 %v669
    %911 = vmatpush1.bf16.msra.mxu0 %v668
    %912 = vmatprep.subr.bf16.mxu0 %v671
    %913 = vmatpush1.bf16.msra.mxu0 %v670
    %914 = vmatprep.subr.bf16.mxu0 %v673
    %915 = vmatpush1.bf16.msra.mxu0 %v672
    %916 = vmatprep.subr.bf16.mxu0 %v675
    %917 = vmatpush1.bf16.msra.mxu0 %v674
    %918 = vmatprep.subr.bf16.mxu0 %v677
    %919 = vmatpush1.bf16.msra.mxu0 %v676
    %920 = vmatprep.subr.bf16.mxu0 %v679
    %921 = vmatpush1.bf16.msra.mxu0 %v678
    %922 = vmatprep.mubr.bf16.mxu0 %v239
    %923 = vmatmul.mubr.bf16.gmra.mrb[0].mxu0 %v238
    %v924 = vpop.f32.mrb[0].mxu0
    %v925 = vadd.f32 %v884, %v924
    %v926 = vpop.f32.mrb[0].mxu0
    %v927 = vadd.f32 %v886, %v926
    %v928 = vpop.f32.mrb[0].mxu0
    %v929 = vpop.f32.mrb[0].mxu0
    %930 = vdwg.mxu0
    %931 = vmatprep.subr.bf16.mxu0 %v681
    %932 = vmatpush1.bf16.msra.mxu0 %v680
    %933 = vmatprep.subr.bf16.mxu0 %v683
    %934 = vmatpush1.bf16.msra.mxu0 %v682
    %935 = vmatprep.subr.bf16.mxu0 %v685
    %936 = vmatpush1.bf16.msra.mxu0 %v684
    %937 = vmatprep.subr.bf16.mxu0 %v687
    %938 = vmatpush1.bf16.msra.mxu0 %v686
    %939 = vmatprep.subr.bf16.mxu0 %v689
    %940 = vmatpush1.bf16.msra.mxu0 %v688
    %941 = vmatprep.subr.bf16.mxu0 %v691
    %942 = vmatpush1.bf16.msra.mxu0 %v690
    %943 = vmatprep.subr.bf16.mxu0 %v693
    %944 = vmatpush1.bf16.msra.mxu0 %v692
    %945 = vmatprep.subr.bf16.mxu0 %v695
    %946 = vmatpush1.bf16.msra.mxu0 %v694
    %947 = vmatprep.subr.bf16.mxu0 0
    %948 = vmatpush1.bf16.msra.mxu0 0
    %949 = vmatprep.subr.bf16.mxu0 0
    %950 = vmatpush1.bf16.msra.mxu0 0
    %951 = vmatprep.subr.bf16.mxu0 0
    %952 = vmatpush1.bf16.msra.mxu0 0
    %953 = vmatprep.subr.bf16.mxu0 0
    %954 = vmatpush1.bf16.msra.mxu0 0
    %955 = vmatprep.subr.bf16.mxu0 0
    %956 = vmatpush1.bf16.msra.mxu0 0
    %957 = vmatprep.subr.bf16.mxu0 0
    %958 = vmatpush1.bf16.msra.mxu0 0
    %959 = vmatprep.subr.bf16.mxu0 0
    %960 = vmatpush1.bf16.msra.mxu0 0
    %961 = vmatprep.subr.bf16.mxu0 0
    %962 = vmatpush1.bf16.msra.mxu0 0
    %963 = vmatprep.mubr.bf16.mxu0 0
    %964 = vmatmul.mubr.bf16.gmra.mrb[0].mxu0 %v240
    %v965 = vpop.f32.mrb[0].mxu0
    %v966 = vadd.f32 %v925, %v965
    %v967 = vpop.f32.mrb[0].mxu0
    %v968 = vadd.f32 %v927, %v967
    %v969 = vpop.f32.mrb[0].mxu0
    %v970 = vpop.f32.mrb[0].mxu0
    %971 = vdwg.mxu0
    %v972 = vmax.f32 %v966, 0.0
    %v973 = vmax.f32 %v968, 0.0
    %v974 = vpack.c.bf16 %v972, %v972
    %v975 = vpack.c.bf16 %v973, %v973
    %v976 = vld [vmem:[#allocation7] sm:$0xff]
    %v977 = vld [vmem:[#allocation7 + $0x8] sm:$0xff]
    %v978 = vld [vmem:[#allocation7 + $0x10] sm:$0xff]
    %v979 = vld [vmem:[#allocation7 + $0x18] sm:$0xff]
    %v980 = vld [vmem:[#allocation7 + $0x20] sm:$0xff]
    %v981 = vld [vmem:[#allocation7 + $0x28] sm:$0xff]
    %v982 = vld [vmem:[#allocation7 + $0x30] sm:$0xff]
    %v983 = vld [vmem:[#allocation7 + $0x38] sm:$0xff]
    %v984 = vld [vmem:[#allocation7 + $0x40] sm:$0xff]
    %v985 = vld [vmem:[#allocation7 + $0x48] sm:$0xff]
    %v986 = vld [vmem:[#allocation7 + $0x50] sm:$0xff]
    %v987 = vld [vmem:[#allocation7 + $0x58] sm:$0xff]
    %v988 = vld [vmem:[#allocation7 + $0x60] sm:$0xff]
    %v989 = vld [vmem:[#allocation7 + $0x68] sm:$0xff]
    %v990 = vld [vmem:[#allocation7 + $0x70] sm:$0xff]
    %v991 = vld [vmem:[#allocation7 + $0x78] sm:$0xff]
    %v992 = vld [vmem:[#allocation7 + $0x80] sm:$0xff]
    %v993 = vld [vmem:[#allocation7 + $0x88] sm:$0xff]
    %v994 = vld [vmem:[#allocation7 + $0x90] sm:$0xff]
    %v995 = vld [vmem:[#allocation7 + $0x98] sm:$0xff]
    %v996 = vld [vmem:[#allocation7 + $0xa0] sm:$0xff]
    %v997 = vld [vmem:[#allocation7 + $0xa8] sm:$0xff]
    %v998 = vld [vmem:[#allocation7 + $0xb0] sm:$0xff]
    %v999 = vld [vmem:[#allocation7 + $0xb8] sm:$0xff]
    %v1000 = vld [vmem:[#allocation7 + $0xc0] sm:$0xff]
    %v1001 = vld [vmem:[#allocation7 + $0xc8] sm:$0xff]
    %v1002 = vld [vmem:[#allocation7 + $0xd0] sm:$0xff]
    %v1003 = vld [vmem:[#allocation7 + $0xd8] sm:$0xff]
    %v1004 = vld [vmem:[#allocation7 + $0xe0] sm:$0xff]
    %v1005 = vld [vmem:[#allocation7 + $0xe8] sm:$0xff]
    %v1006 = vld [vmem:[#allocation7 + $0xf0] sm:$0xff]
    %v1007 = vld [vmem:[#allocation7 + $0xf8] sm:$0xff]
    %v1008 = vld [vmem:[#allocation8] sm:$0x3]
    %v1010 = vlaneseq
    %v1011 = vshrl.u32 %v1010, 7
    %v1012 = vsub.s32 0, %v1011
    %v1013 = vrot.slane %v1008, %v1012
    %v1014 = vlaneseq
    %v1015 = vshrl.u32 %v1014, 7
    %v1016 = vsub.s32 1, %v1015
    %v1017 = vrot.slane %v1008, %v1016
    %v1052 = vunpack.c.l.b16 %v976
    %v1053 = vunpack.c.h.b16 %v976
    %v1054 = vunpack.c.l.b16 %v977
    %v1055 = vunpack.c.h.b16 %v977
    %v1056 = vunpack.c.l.b16 %v978
    %v1057 = vunpack.c.h.b16 %v978
    %v1058 = vunpack.c.l.b16 %v979
    %v1059 = vunpack.c.h.b16 %v979
    %v1060 = vunpack.c.l.b16 %v980
    %v1061 = vunpack.c.h.b16 %v980
    %v1062 = vunpack.c.l.b16 %v981
    %v1063 = vunpack.c.h.b16 %v981
    %v1064 = vunpack.c.l.b16 %v982
    %v1065 = vunpack.c.h.b16 %v982
    %v1066 = vunpack.c.l.b16 %v983
    %v1067 = vunpack.c.h.b16 %v983
    %v1068 = vunpack.c.l.b16 %v984
    %v1069 = vunpack.c.h.b16 %v984
    %v1070 = vunpack.c.l.b16 %v985
    %v1071 = vunpack.c.h.b16 %v985
    %v1072 = vunpack.c.l.b16 %v986
    %v1073 = vunpack.c.h.b16 %v986
    %v1074 = vunpack.c.l.b16 %v987
    %v1075 = vunpack.c.h.b16 %v987
    %v1076 = vunpack.c.l.b16 %v988
    %v1077 = vunpack.c.h.b16 %v988
    %v1078 = vunpack.c.l.b16 %v989
    %v1079 = vunpack.c.h.b16 %v989
    %v1080 = vunpack.c.l.b16 %v990
    %v1081 = vunpack.c.h.b16 %v990
    %v1082 = vunpack.c.l.b16 %v991
    %v1083 = vunpack.c.h.b16 %v991
    %v1084 = vunpack.c.l.b16 %v992
    %v1085 = vunpack.c.h.b16 %v992
    %v1086 = vunpack.c.l.b16 %v993
    %v1087 = vunpack.c.h.b16 %v993
    %v1088 = vunpack.c.l.b16 %v994
    %v1089 = vunpack.c.h.b16 %v994
    %v1090 = vunpack.c.l.b16 %v995
    %v1091 = vunpack.c.h.b16 %v995
    %v1092 = vunpack.c.l.b16 %v996
    %v1093 = vunpack.c.h.b16 %v996
    %v1094 = vunpack.c.l.b16 %v997
    %v1095 = vunpack.c.h.b16 %v997
    %v1096 = vunpack.c.l.b16 %v998
    %v1097 = vunpack.c.h.b16 %v998
    %v1098 = vunpack.c.l.b16 %v999
    %v1099 = vunpack.c.h.b16 %v999
    %v1100 = vunpack.c.l.b16 %v1000
    %v1101 = vunpack.c.h.b16 %v1000
    %v1102 = vunpack.c.l.b16 %v1001
    %v1103 = vunpack.c.h.b16 %v1001
    %v1104 = vunpack.c.l.b16 %v1002
    %v1105 = vunpack.c.h.b16 %v1002
    %v1106 = vunpack.c.l.b16 %v1003
    %v1107 = vunpack.c.h.b16 %v1003
    %v1108 = vunpack.c.l.b16 %v1004
    %v1109 = vunpack.c.h.b16 %v1004
    %v1110 = vunpack.c.l.b16 %v1005
    %v1111 = vunpack.c.h.b16 %v1005
    %v1112 = vunpack.c.l.b16 %v1006
    %v1113 = vunpack.c.h.b16 %v1006
    %v1114 = vunpack.c.l.b16 %v1007
    %v1115 = vunpack.c.h.b16 %v1007
    %v1116 = vpack.c.b16 %v1054, %v1052
    %v1117 = vpack.c.b16 %v1055, %v1053
    %v1118 = vpack.c.b16 %v1058, %v1056
    %v1119 = vpack.c.b16 %v1059, %v1057
    %v1120 = vpack.c.b16 %v1062, %v1060
    %v1121 = vpack.c.b16 %v1063, %v1061
    %v1122 = vpack.c.b16 %v1066, %v1064
    %v1123 = vpack.c.b16 %v1067, %v1065
    %v1124 = vpack.c.b16 %v1070, %v1068
    %v1125 = vpack.c.b16 %v1071, %v1069
    %v1126 = vpack.c.b16 %v1074, %v1072
    %v1127 = vpack.c.b16 %v1075, %v1073
    %v1128 = vpack.c.b16 %v1078, %v1076
    %v1129 = vpack.c.b16 %v1079, %v1077
    %v1130 = vpack.c.b16 %v1082, %v1080
    %v1131 = vpack.c.b16 %v1083, %v1081
    %v1132 = vpack.c.b16 %v1086, %v1084
    %v1133 = vpack.c.b16 %v1087, %v1085
    %v1134 = vpack.c.b16 %v1090, %v1088
    %v1135 = vpack.c.b16 %v1091, %v1089
    %v1136 = vpack.c.b16 %v1094, %v1092
    %v1137 = vpack.c.b16 %v1095, %v1093
    %v1138 = vpack.c.b16 %v1098, %v1096
    %v1139 = vpack.c.b16 %v1099, %v1097
    %v1140 = vpack.c.b16 %v1102, %v1100
    %v1141 = vpack.c.b16 %v1103, %v1101
    %v1142 = vpack.c.b16 %v1106, %v1104
    %v1143 = vpack.c.b16 %v1107, %v1105
    %v1144 = vpack.c.b16 %v1110, %v1108
    %v1145 = vpack.c.b16 %v1111, %v1109
    %v1146 = vpack.c.b16 %v1114, %v1112
    %v1147 = vpack.c.b16 %v1115, %v1113
    %1180 = vmatprep.subr.bf16.mxu0 %v1117
    %1181 = vmatpush1.bf16.msra.mxu0 %v1116
    %1182 = vmatprep.subr.bf16.mxu0 %v1119
    %1183 = vmatpush1.bf16.msra.mxu0 %v1118
    %1184 = vmatprep.subr.bf16.mxu0 %v1121
    %1185 = vmatpush1.bf16.msra.mxu0 %v1120
    %1186 = vmatprep.subr.bf16.mxu0 %v1123
    %1187 = vmatpush1.bf16.msra.mxu0 %v1122
    %1188 = vmatprep.subr.bf16.mxu0 %v1125
    %1189 = vmatpush1.bf16.msra.mxu0 %v1124
    %1190 = vmatprep.subr.bf16.mxu0 %v1127
    %1191 = vmatpush1.bf16.msra.mxu0 %v1126
    %1192 = vmatprep.subr.bf16.mxu0 %v1129
    %1193 = vmatpush1.bf16.msra.mxu0 %v1128
    %1194 = vmatprep.subr.bf16.mxu0 %v1131
    %1195 = vmatpush1.bf16.msra.mxu0 %v1130
    %1196 = vmatprep.subr.bf16.mxu0 %v1133
    %1197 = vmatpush1.bf16.msra.mxu0 %v1132
    %1198 = vmatprep.subr.bf16.mxu0 %v1135
    %1199 = vmatpush1.bf16.msra.mxu0 %v1134
    %1200 = vmatprep.subr.bf16.mxu0 %v1137
    %1201 = vmatpush1.bf16.msra.mxu0 %v1136
    %1202 = vmatprep.subr.bf16.mxu0 %v1139
    %1203 = vmatpush1.bf16.msra.mxu0 %v1138
    %1204 = vmatprep.subr.bf16.mxu0 %v1141
    %1205 = vmatpush1.bf16.msra.mxu0 %v1140
    %1206 = vmatprep.subr.bf16.mxu0 %v1143
    %1207 = vmatpush1.bf16.msra.mxu0 %v1142
    %1208 = vmatprep.subr.bf16.mxu0 %v1145
    %1209 = vmatpush1.bf16.msra.mxu0 %v1144
    %1210 = vmatprep.subr.bf16.mxu0 %v1147
    %1211 = vmatpush1.bf16.msra.mxu0 %v1146
    %1212 = vmatprep.mubr.bf16.mxu0 %v975
    %1213 = vmatmul.mubr.bf16.gmra.mrb[0].mxu0 %v974
    %v1214 = vpop.f32.mrb[0].mxu0
    %v1215 = vadd.f32 %v1013, %v1214
    %v1216 = vpop.f32.mrb[0].mxu0
    %v1217 = vadd.f32 %v1017, %v1216
    %v1218 = vpop.f32.mrb[0].mxu0
    %v1219 = vpop.f32.mrb[0].mxu0
    %1220 = vdwg.mxu0
    %v1221 = vmax.f32 %v1215, 0.0
    %v1222 = vmax.f32 %v1217, 0.0
    %v1223 = vld [vmem:[%s5] sm:$0xff]
    %v1224 = vld [vmem:[%s5 + $0x8] sm:$0xff]
    %v1225 = vadd.f32 %v1221, %v1223
    %v1226 = vadd.f32 %v1222, %v1224
    %v1227 = vpack.c.bf16 %v1225, %v1225
    %v1228 = vpack.c.bf16 %v1226, %v1226
    %v1229 = vld [vmem:[#allocation10] sm:$0xf]
    %v1230 = vld [vmem:[#allocation10 + $0x4] sm:$0xf]
    %v1231 = vld [vmem:[#allocation10 + $0x8] sm:$0xf]
    %v1232 = vld [vmem:[#allocation10 + $0xc] sm:$0xf]
    %v1233 = vld [vmem:[#allocation10 + $0x10] sm:$0xf]
    %v1234 = vld [vmem:[#allocation10 + $0x14] sm:$0xf]
    %v1235 = vld [vmem:[#allocation10 + $0x18] sm:$0xf]
    %v1236 = vld [vmem:[#allocation10 + $0x1c] sm:$0xf]
    %v1237 = vld [vmem:[#allocation10 + $0x20] sm:$0xf]
    %v1238 = vld [vmem:[#allocation10 + $0x24] sm:$0xf]
    %v1239 = vld [vmem:[#allocation10 + $0x28] sm:$0xf]
    %v1240 = vld [vmem:[#allocation10 + $0x2c] sm:$0xf]
    %v1241 = vld [vmem:[#allocation10 + $0x30] sm:$0xf]
    %v1242 = vld [vmem:[#allocation10 + $0x34] sm:$0xf]
    %v1243 = vld [vmem:[#allocation10 + $0x38] sm:$0xf]
    %v1244 = vld [vmem:[#allocation10 + $0x3c] sm:$0xf]
    %v1245 = vld [vmem:[#allocation10 + $0x40] sm:$0xf]
    %v1246 = vld [vmem:[#allocation10 + $0x44] sm:$0xf]
    %v1247 = vld [vmem:[#allocation10 + $0x48] sm:$0xf]
    %v1248 = vld [vmem:[#allocation10 + $0x4c] sm:$0xf]
    %v1249 = vld [vmem:[#allocation10 + $0x50] sm:$0xf]
    %v1250 = vld [vmem:[#allocation10 + $0x54] sm:$0xf]
    %v1251 = vld [vmem:[#allocation10 + $0x58] sm:$0xf]
    %v1252 = vld [vmem:[#allocation10 + $0x5c] sm:$0xf]
    %v1253 = vld [vmem:[#allocation10 + $0x60] sm:$0xf]
    %v1254 = vld [vmem:[#allocation10 + $0x64] sm:$0xf]
    %v1255 = vld [vmem:[#allocation10 + $0x68] sm:$0xf]
    %v1256 = vld [vmem:[#allocation10 + $0x6c] sm:$0xf]
    %v1257 = vld [vmem:[#allocation10 + $0x70] sm:$0xf]
    %v1258 = vld [vmem:[#allocation10 + $0x74] sm:$0xf]
    %v1259 = vld [vmem:[#allocation10 + $0x78] sm:$0xf]
    %v1260 = vld [vmem:[#allocation10 + $0x7c] sm:$0xf]
    %v1261 = vld [vmem:[%s7] sm:$0x1]
    %v1263 = vlaneseq
    %v1264 = vshrl.u32 %v1263, 7
    %v1265 = vsub.s32 0, %v1264
    %v1266 = vrot.slane %v1261, %v1265
    %v1300 = vunpack.c.l.b16 %v1229
    %v1301 = vunpack.c.l.b16 %v1230
    %v1302 = vunpack.c.l.b16 %v1231
    %v1303 = vunpack.c.l.b16 %v1232
    %v1304 = vunpack.c.l.b16 %v1233
    %v1305 = vunpack.c.l.b16 %v1234
    %v1306 = vunpack.c.l.b16 %v1235
    %v1307 = vunpack.c.l.b16 %v1236
    %v1308 = vunpack.c.l.b16 %v1237
    %v1309 = vunpack.c.l.b16 %v1238
    %v1310 = vunpack.c.l.b16 %v1239
    %v1311 = vunpack.c.l.b16 %v1240
    %v1312 = vunpack.c.l.b16 %v1241
    %v1313 = vunpack.c.l.b16 %v1242
    %v1314 = vunpack.c.l.b16 %v1243
    %v1315 = vunpack.c.l.b16 %v1244
    %v1316 = vunpack.c.l.b16 %v1245
    %v1317 = vunpack.c.l.b16 %v1246
    %v1318 = vunpack.c.l.b16 %v1247
    %v1319 = vunpack.c.l.b16 %v1248
    %v1320 = vunpack.c.l.b16 %v1249
    %v1321 = vunpack.c.l.b16 %v1250
    %v1322 = vunpack.c.l.b16 %v1251
    %v1323 = vunpack.c.l.b16 %v1252
    %v1324 = vunpack.c.l.b16 %v1253
    %v1325 = vunpack.c.l.b16 %v1254
    %v1326 = vunpack.c.l.b16 %v1255
    %v1327 = vunpack.c.l.b16 %v1256
    %v1328 = vunpack.c.l.b16 %v1257
    %v1329 = vunpack.c.l.b16 %v1258
    %v1330 = vunpack.c.l.b16 %v1259
    %v1331 = vunpack.c.l.b16 %v1260
    %v1332 = vpack.c.b16 %v1301, %v1300
    %v1333 = vpack.c.b16 %v1303, %v1302
    %v1334 = vpack.c.b16 %v1305, %v1304
    %v1335 = vpack.c.b16 %v1307, %v1306
    %v1336 = vpack.c.b16 %v1309, %v1308
    %v1337 = vpack.c.b16 %v1311, %v1310
    %v1338 = vpack.c.b16 %v1313, %v1312
    %v1339 = vpack.c.b16 %v1315, %v1314
    %v1340 = vpack.c.b16 %v1317, %v1316
    %v1341 = vpack.c.b16 %v1319, %v1318
    %v1342 = vpack.c.b16 %v1321, %v1320
    %v1343 = vpack.c.b16 %v1323, %v1322
    %v1344 = vpack.c.b16 %v1325, %v1324
    %v1345 = vpack.c.b16 %v1327, %v1326
    %v1346 = vpack.c.b16 %v1329, %v1328
    %v1347 = vpack.c.b16 %v1331, %v1330
    %1364 = vmatprep.subr.bf16.mxu0 0
    %1365 = vmatpush1.bf16.msra.mxu0 %v1332
    %1366 = vmatprep.subr.bf16.mxu0 0
    %1367 = vmatpush1.bf16.msra.mxu0 %v1333
    %1368 = vmatprep.subr.bf16.mxu0 0
    %1369 = vmatpush1.bf16.msra.mxu0 %v1334
    %1370 = vmatprep.subr.bf16.mxu0 0
    %1371 = vmatpush1.bf16.msra.mxu0 %v1335
    %1372 = vmatprep.subr.bf16.mxu0 0
    %1373 = vmatpush1.bf16.msra.mxu0 %v1336
    %1374 = vmatprep.subr.bf16.mxu0 0
    %1375 = vmatpush1.bf16.msra.mxu0 %v1337
    %1376 = vmatprep.subr.bf16.mxu0 0
    %1377 = vmatpush1.bf16.msra.mxu0 %v1338
    %1378 = vmatprep.subr.bf16.mxu0 0
    %1379 = vmatpush1.bf16.msra.mxu0 %v1339
    %1380 = vmatprep.subr.bf16.mxu0 0
    %1381 = vmatpush1.bf16.msra.mxu0 %v1340
    %1382 = vmatprep.subr.bf16.mxu0 0
    %1383 = vmatpush1.bf16.msra.mxu0 %v1341
    %1384 = vmatprep.subr.bf16.mxu0 0
    %1385 = vmatpush1.bf16.msra.mxu0 %v1342
    %1386 = vmatprep.subr.bf16.mxu0 0
    %1387 = vmatpush1.bf16.msra.mxu0 %v1343
    %1388 = vmatprep.subr.bf16.mxu0 0
    %1389 = vmatpush1.bf16.msra.mxu0 %v1344
    %1390 = vmatprep.subr.bf16.mxu0 0
    %1391 = vmatpush1.bf16.msra.mxu0 %v1345
    %1392 = vmatprep.subr.bf16.mxu0 0
    %1393 = vmatpush1.bf16.msra.mxu0 %v1346
    %1394 = vmatprep.subr.bf16.mxu0 0
    %1395 = vmatpush1.bf16.msra.mxu0 %v1347
    %1396 = vmatprep.mubr.bf16.mxu0 %v1228
    %1397 = vmatmul.mubr.bf16.gmra.mrb[0].mxu0 %v1227
    %v1398 = vpop.f32.mrb[0].mxu0
    %v1399 = vadd.f32 %v1266, %v1398
    %v1400 = vpop.f32.mrb[0].mxu0
    %v1401 = vpop.f32.mrb[0].mxu0
    %v1402 = vpop.f32.mrb[0].mxu0
    %1403 = vdwg.mxu0
    %1404 = vst [vmem:[#allocation11] sm:$0xff] %v1399
    // Predicated region
    $region54: #{tpu_custom_call.1} parent=1 // pred_check
      _
    $region55: #{tpu_custom_call.1} parent=1 // pred_check_branch
      %1406 = sbr.rel (0) target = $region57
    $region56: #{tpu_custom_call.1} parent=1 // pred_region
      %s1408 = ssub.s32 128, 128
      %1409 = vsyncadd [#allocation4], %s1408
      %s1411 = sshll.u32 [#allocation11], 4
      %s1412 = int_to_ptr.vmem [resolvable:$true] %s1411
      %1414 = dma.vmem_to_hbm [thread:$0]  %s1412, 128, %s8, [#allocation4]
    $region57: #{tpu_custom_call.1} parent=1 // pred_fallthru
      _
    // Predicated region
    $region58: #{tpu_custom_call.1} parent=1 // pred_check
      _
    $region59: #{tpu_custom_call.1} parent=1 // pred_check_branch
      %1416 = sbr.rel (0) target = $region61
    $region60: #{tpu_custom_call.1} parent=1 // pred_region
      %1417 = dma.done [#allocation4], 128
    $region61: #{tpu_custom_call.1} parent=1 // pred_fallthru
      _
    %1418 = vsyncpa [#allocation3], 1
    %1419 = vsyncpa [#allocation6], 1
    %1420 = vsyncpa [#allocation9], 1
    %1421 = vsyncpa [#allocation4], 1

</llo_original>
